<compile_context>
chip_gen: v7x
topology: tpu7x:2x2x1
jax: 0.10.0
libtpu: 0.0.40
codegen_flags: <defaults>
</compile_context>

<pallas_src>
from functools import partial

import jax
import jax.numpy as jnp
from jax import lax
from jax.experimental import pallas as pl
from jax.experimental.pallas import tpu as pltpu


def _round_up(x, m):
    return (x + m - 1) // m * m


def _device_defaults():
    """Generation-aware tiling / VMEM knobs (v5e / v6e / v7x)."""
    kind = ""
    try:
        kind = jax.devices()[0].device_kind.lower()
    except Exception:
        pass
    vmem_cap = None
    try:
        vmem_cap = int(pltpu.get_tpu_info().vmem_capacity_bytes)
    except Exception:
        vmem_cap = None
    if not vmem_cap or vmem_cap <= 0:
        vmem_cap = (64 << 20) if "v7" in kind else (128 << 20)
    mxu_n = 256 if ("v6" in kind or "v7" in kind) else 128   # MXU N width
    n_cores = 2 if "v7" in kind else 1                        # TensorCores/chip
    vmem_limit = min(3 * vmem_cap // 4, 96 << 20)
    ws_budget = min(vmem_cap // 4, 32 << 20)                  # per-step working set
    return mxu_n, n_cores, vmem_limit, ws_budget


# --------------------------------------------------------------------------
# Kernels
# --------------------------------------------------------------------------
def _matmul_bn_lrelu_kernel(cols_ref, w_ref, shift_ref, o_ref, *,
                            neg_slope, weights_resident):
    # Small-Cin path: wrapper-built lane-dense im2col.
    # cols_ref:  (1, TM, KKC)               bf16 im2col rows
    # w_ref:     (num_j | 1, KKC, CT)       bf16 BN-scale-folded weights
    # shift_ref: (num_j | 1, 1, CT)         f32 folded BN shift
    # o_ref:     (1, TM, CT)                bf16 output tile (lane-dense)
    j = pl.program_id(2)
    w = w_ref[j] if weights_resident else w_ref[0]
    b = shift_ref[j] if weights_resident else shift_ref[0]
    y = jnp.dot(cols_ref[0], w, preferred_element_type=jnp.float32)
    y = y + b                                   # BatchNorm (eval, scale folded)
    y = jnp.where(y >= 0, y, neg_slope * y)     # LeakyReLU
    o_ref[0] = y.astype(o_ref.dtype)


def _conv_bn_lrelu_kernel(x_ref, w_ref, shift_ref, o_ref, col_ref, *,
                          TH, W, Cin, K, neg_slope, weights_resident):
    # Large-Cin path: in-kernel im2col from a halo row band.
    # x_ref:   (1, TH + 2*pad, W + 2*pad, Cin)  bf16 halo row band
    # col_ref: (TH, W, K*K*Cin)                 bf16 im2col scratch
    # INVARIANT: col_ref is built only at j == 0 and reused for j > 0, so the
    # Cout axis MUST stay the innermost, sequential ("arbitrary") grid axis.
    j = pl.program_id(2)
    TM = TH * W
    KKC = K * K * Cin

    @pl.when(j == 0)
    def _build_im2col():
        # Direct ref-window loads (no large live temp).  Stores are Cin lanes
        # wide -> lane-dense for Cin >= 128, acceptable for Cin >= 32.
        # TODO(synk): double-buffer col_ref / use pltpu.roll for kw shifts.
        for kh in range(K):
            for kw in range(K):
                c0 = (kh * K + kw) * Cin
                col_ref[:, :, c0:c0 + Cin] = x_ref[0, kh:kh + TH, kw:kw + W, :]

    cols = col_ref[...].reshape(TM, KKC)
    w = w_ref[j] if weights_resident else w_ref[0]
    b = shift_ref[j] if weights_resident else shift_ref[0]
    y = jnp.dot(cols, w, preferred_element_type=jnp.float32)
    y = y + b
    y = jnp.where(y >= 0, y, neg_slope * y)
    o_ref[0] = y.astype(o_ref.dtype)


# --------------------------------------------------------------------------
# Tiling policy
# --------------------------------------------------------------------------
def _pick_row_tile(N, H, W, Cin, K, cout_tile, kkc, w_block_bytes,
                   ws_budget, n_cores, small_cin):
    """Largest row tile whose FULL per-step working set fits the budget,
    while keeping enough parallel grid blocks for megacore occupancy."""
    pad = K // 2

    def step_bytes(th):
        tm = th * W
        out_b = 2 * tm * cout_tile * 2                           # bf16 out x2
        if small_cin:
            in_b = 2 * tm * kkc * 2                              # cols block x2
            scratch = 0
        else:
            in_b = 2 * (th + 2 * pad) * (W + 2 * pad) * Cin * 2  # halo band x2
            scratch = tm * kkc * 2                               # im2col scratch
        return out_b + in_b + scratch + 2 * w_block_bytes

    cands = sorted({th for th in range(1, H + 1)
                    if H % th == 0 and ((th * W) % 16 == 0 or th == H)})
    fit = [th for th in cands if step_bytes(th) <= ws_budget] or [cands[0]]
    wants = (8, 2, 1) if n_cores > 1 else (1,)
    for want in wants:
        good = [th for th in fit if N * (H // th) >= want]
        if good:
            return max(good)
    return max(fit)


# --------------------------------------------------------------------------
# Wrapper
# --------------------------------------------------------------------------
def conv_block(x_nchw, w_oihw, gamma, beta, run_mean, run_var, *,
               stride=1, groups=1, eps=1e-5, neg_slope=0.01,
               row_tile=None, cout_tile=None, out_dtype=jnp.bfloat16):
    N, Cin, H, W = x_nchw.shape
    Cout, Cin_w, K, K2 = w_oihw.shape
    assert Cin_w == Cin and K == K2
    assert stride == 1 and groups == 1, \
        "TODO(synk): stride>1 / groups>1 not implemented"
    assert K % 2 == 1, "auto_pad(kernel_size) is 'same' only for odd kernels"
    pad = K // 2
    KKC = K * K * Cin

    mxu_n, n_cores, vmem_limit, ws_budget = _device_defaults()
    COUT_TILE = cout_tile if cout_tile is not None \
        else min(mxu_n, _round_up(Cout, 128))
    assert COUT_TILE % 128 == 0
    Cout_p = _round_up(Cout, COUT_TILE)
    num_j = Cout_p // COUT_TILE

    # ---- fold BatchNorm (eval-mode running stats) into the conv weights ----
    inv_std = 1.0 / jnp.sqrt(run_var.astype(jnp.float32) + eps)
    scale = gamma.astype(jnp.float32) * inv_std                       # (Cout,)
    shift = beta.astype(jnp.float32) - run_mean.astype(jnp.float32) * scale
    w_f = w_oihw.astype(jnp.float32) * scale[:, None, None, None]     # fold scale
    w_kkio = jnp.transpose(w_f, (2, 3, 1, 0)).reshape(KKC, Cout)      # (kh,kw,ci)
    w_kkio = jnp.pad(w_kkio, ((0, 0), (0, Cout_p - Cout))).astype(jnp.bfloat16)
    w_tiles = w_kkio.reshape(KKC, num_j, COUT_TILE).transpose(1, 0, 2)
    shift_t = jnp.pad(shift, (0, Cout_p - Cout)).reshape(num_j, 1, COUT_TILE)

    w_bytes = num_j * KKC * COUT_TILE * 2
    weights_resident = w_bytes <= (4 << 20)
    if weights_resident:
        w_spec = pl.BlockSpec((num_j, KKC, COUT_TILE), lambda n, t, j: (0, 0, 0))
        s_spec = pl.BlockSpec((num_j, 1, COUT_TILE), lambda n, t, j: (0, 0, 0))
        w_block_bytes = w_bytes
    else:
        # TODO(synk): very large weights are re-fetched once per (n, row-tile);
        #             hoist j to the outermost grid axis for that regime.
        w_spec = pl.BlockSpec((1, KKC, COUT_TILE), lambda n, t, j: (j, 0, 0))
        s_spec = pl.BlockSpec((1, 1, COUT_TILE), lambda n, t, j: (j, 0, 0))
        w_block_bytes = KKC * COUT_TILE * 2

    small_cin = Cin < 32
    TH = row_tile if row_tile is not None else _pick_row_tile(
        N, H, W, Cin, K, COUT_TILE, KKC, w_block_bytes, ws_budget, n_cores,
        small_cin)
    assert H % TH == 0
    TM = TH * W
    assert TM % 16 == 0 or TH == H
    n_t = H // TH
    Hp, Wp = H + 2 * pad, W + 2 * pad
    grid = (N, n_t, num_j)

    # ---- wrapper-side layout prep (bf16 to halve the pass cost) ----
    x_nhwc = jnp.transpose(x_nchw, (0, 2, 3, 1)).astype(jnp.bfloat16)
    x_pad = jnp.pad(x_nhwc, ((0, 0), (pad, pad), (pad, pad), (0, 0)))

    if small_cin:
        # Lane-dense wrapper-side im2col: (kh, kw, cin) channel order matches
        # the weight reshape above.
        cols = jnp.concatenate(
            [x_pad[:, kh:kh + H, kw:kw + W, :]
             for kh in range(K) for kw in range(K)],
            axis=-1).reshape(N, H * W, KKC)
        kern = partial(_matmul_bn_lrelu_kernel, neg_slope=neg_slope,
                       weights_resident=weights_resident)
        in_specs = [pl.BlockSpec((1, TM, KKC), lambda n, t, j: (n, t, 0)),
                    w_spec, s_spec]
        scratch_shapes = []
        operands = (cols, w_tiles, shift_t)
        in_bytes = cols.size * 2
    else:
        # Pre-banded halo row tiles: only TH + 2*pad rows resident per step
        # (cost: (TH+2*pad)/TH input duplication in HBM).
        x_bands = jnp.stack(
            [x_pad[:, t * TH: t * TH + TH + 2 * pad] for t in range(n_t)],
            axis=1).reshape(N * n_t, TH + 2 * pad, Wp, Cin)
        kern = partial(_conv_bn_lrelu_kernel, TH=TH, W=W, Cin=Cin, K=K,
                       neg_slope=neg_slope, weights_resident=weights_resident)
        in_specs = [pl.BlockSpec((1, TH + 2 * pad, Wp, Cin),
                                 lambda n, t, j: (n * n_t + t, 0, 0, 0)),
                    w_spec, s_spec]
        scratch_shapes = [pltpu.VMEM((TH, W, KKC), jnp.bfloat16)]
        operands = (x_bands, w_tiles, shift_t)
        in_bytes = x_bands.size * 2

    flops = 2 * N * H * W * KKC * Cout_p
    bytes_accessed = (in_bytes + w_tiles.size * 2 + shift_t.size * 4
                      + N * H * W * Cout_p * 2)

    out = pl.pallas_call(
        kern,
        out_shape=jax.ShapeDtypeStruct((N, H * W, Cout_p), jnp.bfloat16),
        grid_spec=pltpu.PrefetchScalarGridSpec(
            num_scalar_prefetch=0,
            grid=grid,
            in_specs=in_specs,
            out_specs=pl.BlockSpec((1, TM, COUT_TILE),
                                   lambda n, t, j: (n, t, j)),
            scratch_shapes=scratch_shapes,
        ),
        compiler_params=pltpu.CompilerParams(
            # j (Cout tiles) must remain innermost + "arbitrary": the im2col
            # scratch of the large-Cin path is built at j == 0 and reused.
            dimension_semantics=("parallel", "parallel", "arbitrary"),
            vmem_limit_bytes=vmem_limit,
        ),
        cost_estimate=pl.CostEstimate(flops=flops, transcendentals=0,
                                      bytes_accessed=bytes_accessed),
    )(*operands)

    out = out.reshape(N, H, W, Cout_p)[..., :Cout]
    # TODO(synk): consumers that accept NHWC could skip this transpose pass.
    return jnp.transpose(out, (0, 3, 1, 2)).astype(out_dtype)


# --------------------------------------------------------------------------
# Reference + tests
# --------------------------------------------------------------------------
def reference(x_nchw, w_oihw_scaled, shift, neg_slope=0.01):
    """Conv with BN-scale already folded into the weights, + shift + LeakyReLU."""
    y = lax.conv_general_dilated(
        x_nchw, w_oihw_scaled, window_strides=(1, 1), padding="SAME",
        dimension_numbers=("NCHW", "OIHW", "NCHW"),
        precision=lax.Precision.HIGHEST)
    y = y + shift[None, :, None, None]
    return jnp.where(y >= 0, y, neg_slope * y)


def _run_case(N, Cin, H, W, Cout, K, case_key, row_tile=None, cout_tile=None):
    kx, kw, kg, kb, km, kv = jax.random.split(case_key, 6)
    x = jax.random.normal(kx, (N, Cin, H, W), dtype=jnp.float32)
    w = jax.random.normal(kw, (Cout, Cin, K, K), dtype=jnp.float32) * 0.1
    gamma = jax.random.uniform(kg, (Cout,), minval=0.5, maxval=1.5)
    beta = jax.random.normal(kb, (Cout,)) * 0.1
    run_mean = jax.random.normal(km, (Cout,)) * 0.1
    run_var = jax.random.uniform(kv, (Cout,), minval=0.5, maxval=1.5)

    out = conv_block(x, w, gamma, beta, run_mean, run_var,
                     row_tile=row_tile, cout_tile=cout_tile)
    out = jax.block_until_ready(out)
    assert out.shape == (N, Cout, H, W)
    out_f32 = out.astype(jnp.float32)

    # Reference mirrors the kernel's quantization: bf16 inputs, BN scale
    # folded into bf16 weights, f32 accumulation, bf16 output store.
    eps = 1e-5
    scale = gamma / jnp.sqrt(run_var + eps)
    shift = beta - run_mean * scale
    x_r = x.astype(jnp.bfloat16).astype(jnp.float32)
    w_r = (w * scale[:, None, None, None]).astype(jnp.bfloat16).astype(jnp.float32)
    ref = reference(x_r, w_r, shift)
    err = float(jnp.max(jnp.abs(out_f32 - ref)))
    assert jnp.allclose(out_f32, ref, atol=2.5e-2, rtol=2.5e-2), \
        f"mismatch vs reference (max abs err {err})"


if __name__ == "__main__":
    key = jax.random.PRNGKey(0)
    k1, k2, k3 = jax.random.split(key, 3)
    # Case 1: module-typical small shape (small Cin -> wrapper im2col path).
    _run_case(N=2, Cin=4, H=16, W=16, Cout=8, K=3, case_key=k1)
    # Case 2: multi Cout-tile path (resident weights indexed with ref[j]).
    _run_case(N=2, Cin=3, H=16, W=16, Cout=160, K=3, case_key=k2,
              row_tile=8, cout_tile=128)
    # Case 3: large-Cin path (in-kernel im2col from halo row bands).
    _run_case(N=1, Cin=32, H=16, W=16, Cout=64, K=3, case_key=k3, row_tile=8)
    print("KERNEL_OK")
</pallas_src>

<mosaic_0001>
module attributes {stable_mosaic.version = 11 : i64} {
  func.func @_matmul_bn_lrelu_kernel(%arg0: i32, %arg1: i32, %arg2: i32, %arg3: memref<1x256x36xbf16, #tpu.memory_space<vmem>>, %arg4: memref<1x36x128xbf16, #tpu.memory_space<vmem>>, %arg5: memref<1x1x128xf32, #tpu.memory_space<vmem>>, %arg6: memref<1x256x128xbf16, #tpu.memory_space<vmem>>) attributes {dimension_semantics = [#tpu.dimension_semantics<parallel>, #tpu.dimension_semantics<parallel>, #tpu.dimension_semantics<arbitrary>], iteration_bounds = array<i64: 2, 1, 1>, scalar_prefetch = 0 : i64, scratch_operands = 0 : i64, tpu.core_type = #tpu.core_type<tc>, window_params = [{transform_indices = @transform_0, window_bounds = array<i64: 1, 256, 36>}, {pipeline_mode = #tpu.pipeline_mode<synchronous>, transform_indices = @transform_1, window_bounds = array<i64: 1, 36, 128>}, {pipeline_mode = #tpu.pipeline_mode<synchronous>, transform_indices = @transform_2, window_bounds = array<i64: 1, 1, 128>}, {transform_indices = @transform_3, window_bounds = array<i64: 1, 256, 128>}]} {
    %0 = arith.index_cast %arg2 : i32 to index
    %c0 = arith.constant 0 : index
    %c0_0 = arith.constant 0 : index
    %1 = vector.load %arg4[%0, %c0, %c0_0] : memref<1x36x128xbf16, #tpu.memory_space<vmem>>, vector<1x36x128xbf16>
    %2 = vector.shape_cast %1 : vector<1x36x128xbf16> to vector<36x128xbf16>
    %3 = arith.index_cast %arg2 : i32 to index
    %c0_1 = arith.constant 0 : index
    %c0_2 = arith.constant 0 : index
    %4 = vector.load %arg5[%3, %c0_1, %c0_2] : memref<1x1x128xf32, #tpu.memory_space<vmem>>, vector<1x1x128xf32>
    %5 = vector.shape_cast %4 : vector<1x1x128xf32> to vector<1x128xf32>
    %c0_3 = arith.constant 0 : index
    %c0_4 = arith.constant 0 : index
    %c0_5 = arith.constant 0 : index
    %6 = vector.load %arg3[%c0_3, %c0_4, %c0_5] : memref<1x256x36xbf16, #tpu.memory_space<vmem>>, vector<1x256x36xbf16>
    %7 = vector.shape_cast %6 : vector<1x256x36xbf16> to vector<256x36xbf16>
    %cst = arith.constant dense<0.000000e+00> : vector<256x128xf32>
    %8 = tpu.matmul %7, %2, %cst {dimension_numbers = #tpu.dot_dimension_numbers<[1], [0], [0], [1], [0, 0, 1, 1], [], []>} : vector<256x36xbf16>, vector<36x128xbf16>, vector<256x128xf32> -> vector<256x128xf32>
    %9 = vector.broadcast %5 : vector<1x128xf32> to vector<256x128xf32>
    %10 = arith.addf %8, %9 : vector<256x128xf32>
    %cst_6 = arith.constant 0.000000e+00 : f32
    %11 = vector.broadcast %cst_6 : f32 to vector<256x128xf32>
    %12 = arith.cmpf oge, %10, %11 : vector<256x128xf32>
    %cst_7 = arith.constant 0.00999999977 : f32
    %13 = vector.broadcast %cst_7 : f32 to vector<256x128xf32>
    %14 = arith.mulf %13, %10 : vector<256x128xf32>
    %15 = arith.select %12, %10, %14 : vector<256x128xi1>, vector<256x128xf32>
    %16 = arith.truncf %15 : vector<256x128xf32> to vector<256x128xbf16>
    %c0_8 = arith.constant 0 : index
    %c0_9 = arith.constant 0 : index
    %c0_10 = arith.constant 0 : index
    %17 = vector.load %arg6[%c0_8, %c0_9, %c0_10] : memref<1x256x128xbf16, #tpu.memory_space<vmem>>, vector<1x256x128xbf16>
    %18 = vector.shape_cast %17 : vector<1x256x128xbf16> to vector<256x128xbf16>
    %19 = vector.shape_cast %16 : vector<256x128xbf16> to vector<1x256x128xbf16>
    tpu.vector_store %arg6[%c0_8, %c0_9, %c0_10], %19 {strides = array<i32>} : memref<1x256x128xbf16, #tpu.memory_space<vmem>>, vector<1x256x128xbf16>,
    return
  }
  func.func @transform_0(%arg0: i32, %arg1: i32, %arg2: i32) -> (i32, i32, i32) {
    %c0_i32 = arith.constant 0 : i32
    %c0_i32_0 = arith.constant 0 : i32
    return %arg0, %arg1, %c0_i32 : i32, i32, i32
  }
  func.func @transform_1(%arg0: i32, %arg1: i32, %arg2: i32) -> (i32, i32, i32) {
    %c0_i32 = arith.constant 0 : i32
    %c0_i32_0 = arith.constant 0 : i32
    %c0_i32_1 = arith.constant 0 : i32
    %c0_i32_2 = arith.constant 0 : i32
    return %c0_i32, %c0_i32_0, %c0_i32_1 : i32, i32, i32
  }
  func.func @transform_2(%arg0: i32, %arg1: i32, %arg2: i32) -> (i32, i32, i32) {
    %c0_i32 = arith.constant 0 : i32
    %c0_i32_0 = arith.constant 0 : i32
    %c0_i32_1 = arith.constant 0 : i32
    %c0_i32_2 = arith.constant 0 : i32
    return %c0_i32, %c0_i32_0, %c0_i32_1 : i32, i32, i32
  }
  func.func @transform_3(%arg0: i32, %arg1: i32, %arg2: i32) -> (i32, i32, i32) {
    %c0_i32 = arith.constant 0 : i32
    return %arg0, %arg1, %arg2 : i32, i32, i32
  }
}

</mosaic_0001>

<llo_original>
// kernel: tpu_custom_call.1
$region0: #{tpu_custom_call.1}
  #allocation0 [shape = 'u32[]', space=smem, size = 0x4, offset = 0x4, fixed_abs, tag = 'smem constant byte address 0x4 - core index']
  #allocation1 [shape = 'u32[144,128]{1,0:T(1,128)}', space=vmem, size = 0x12000, scoped, tag = 'internal scratch']
  %s0 = inlined_call_operand.hbm [shape: bf16[2,256,36], index: 0, kind: input, shape index: {}]
  %s1 = inlined_call_operand.hbm [shape: bf16[1,36,128], index: 1, kind: input, shape index: {}]
  %s2 = inlined_call_operand.hbm [shape: f32[1,1,128], index: 2, kind: input, shape index: {}]
  %s3 = inlined_call_operand.hbm [shape: bf16[2,256,128], index: 3, kind: output, shape index: {}]
  %s4 = sld [smem:[#allocation0]]
  $region57: #{tpu_custom_call.1} parent=0
    _
  %s6 = ssub.s32 1, %s4
  %s7 = scalar_select 0, %s6, %s4
  $region1: #{tpu_custom_call.1} parent=0
    #allocation2 [shape = 'u8[131072]{0}', space=vmem, size = 0x20000, scoped, tag = 'input window, operand 0']
    #allocation3 [shape = 's32[2]{0}', space=sflag, size = 0x8, scoped, tag = 'scoped memory for tpu_custom_call.1']
    #allocation4 [shape = 's32[2]{0}', space=sflag, size = 0x8, scoped, tag = 'scoped memory for tpu_custom_call.1']
    #allocation5 [shape = 'u8[10240]{0}', space=vmem, size = 0x2800, scoped, tag = 'input window, operand 1, single buffered']
    #allocation6 [shape = 's32[1]{0}', space=sflag, size = 0x4, scoped, tag = 'scoped memory for tpu_custom_call.1']
    #allocation7 [shape = 'u8[512]{0}', space=vmem, size = 0x400, scoped, tag = 'input window, operand 2, single buffered']
    #allocation8 [shape = 'u8[131072]{0}', space=vmem, size = 0x20000, scoped, tag = 'output window, operand 0']
    %8 = vsyncpa [#allocation3], 0
    %s9 = scalar_lea.sflag [#allocation3], 1
    %10 = vsyncpa %s9, 0
    %11 = vsyncpa [#allocation6], 0
    %12 = vsyncpa [#allocation4], 0
    %s13 = scalar_lea.sflag [#allocation4], 1
    %14 = vsyncpa %s13, 0
    loop: start=0, step=1, limit=4
    $region2: #{tpu_custom_call.1} parent=1 // loop_pre_header
      _
    $region3: #{tpu_custom_call.1} parent=1 // loop_header
      %s16 = sphi 0, %s20
      %p17 = scmp.ge.s32.totalorder %s16, 4
      %s23 = sphi 0, %s42
      %s24 = sphi 0, %s38
      %s25 = sphi 0, %s34
      %s26 = sphi 0, %s23
      %s27 = sphi 0, %s24
      %s28 = sphi 0, %s25
      %s29 = sphi 0, %s26
      %s30 = sphi 0, %s27
      %s31 = sphi 0, %s28
      %s47 = sphi 0, %s49
      %s50 = sphi 0, %s47
      %s51 = sphi 0, %s50
      %s67 = sphi 0, %s51
      %s71 = sphi 0, %s71
      %s73 = sphi 0, %s71
      %s74 = sphi 0, %s73
      %s88 = sphi 0, %s74
      %s92 = sphi 0, %s92
      %s94 = sphi 0, %s92
      %s95 = sphi 0, %s94
      %s109 = sphi 0, %s95
      %s119 = sphi 0, %s121
      %s122 = sphi 0, %s119
      %s123 = sphi 0, %s122
      %s139 = sphi 0, %s123
    $region4: #{tpu_custom_call.1} parent=1 // loop_header_branch
      %19 = sbr.rel (%p17) target = $region8
    $region5: #{tpu_custom_call.1} parent=1 // loop_body
      %s21 = ssub.s32 %s16, 1
      %s22 = ssub.s32 %s16, 2
      %s32 = sadd.s32 1, %s25
      %p33 = scmp.ge.s32.totalorder %s32, 1
      %s34 = scalar_select %p33, 0, %s32
      %s35 = sadd.s32 1, %s24
      %s36 = scalar_select %p33, %s35, %s24
      %p37 = scmp.ge.s32.totalorder %s36, 1
      %s38 = scalar_select %p37, 0, %s36
      %s39 = sadd.s32 1, %s23
      %s40 = scalar_select %p37, %s39, %s23
      %p41 = scmp.ge.s32.totalorder %s40, 2
      %s42 = scalar_select %p41, 0, %s40
      %s43 = ssub.s32 %s23, %s42
      %s44 = ssub.s32 %s24, %s38
      %s45 = sor.u32 %s43, %s44
      %p46 = scmp.eq.s32.totalorder %s45, 0
      %s48 = sadd.s32 %s47, 1
      %s49 = scalar_select %p46, %s47, %s48
      %p52 = pneg %p46
      %p53 = scmp.eq.s32.totalorder %s16, 1
      %p54 = por %p52, %p53
      %p55 = scmp.ne.s32.totalorder %s47, %s50
      %p56 = scmp.eq.s32.totalorder %s16, 0
      %p57 = por %p55, %p56
      %p58 = scmp.ne.s32.totalorder %s47, %s50
      %p59 = scmp.eq.s32.totalorder %s21, 1
      %p60 = por %p58, %p59
      %p61 = scmp.ne.s32.totalorder %s50, %s51
      %p62 = scmp.eq.s32.totalorder %s21, 0
      %p63 = por %p61, %p62
      %p64 = scmp.ne.s32.totalorder %s50, %s51
      %p65 = scmp.eq.s32.totalorder %s22, 1
      %p66 = por %p64, %p65
      %p68 = scmp.ne.s32.totalorder %s51, %s67
      %p69 = scmp.eq.s32.totalorder %s22, 0
      %p70 = por %p68, %p69
      %s72 = sadd.s32 %s71, 1
      %p75 = scmp.eq.s32.totalorder %s16, 1
      %p76 = scmp.ne.s32.totalorder %s71, %s73
      %p77 = scmp.eq.s32.totalorder %s16, 0
      %p78 = por %p76, %p77
      %p79 = scmp.ne.s32.totalorder %s71, %s73
      %p80 = scmp.eq.s32.totalorder %s21, 1
      %p81 = por %p79, %p80
      %p82 = scmp.ne.s32.totalorder %s73, %s74
      %p83 = scmp.eq.s32.totalorder %s21, 0
      %p84 = por %p82, %p83
      %p85 = scmp.ne.s32.totalorder %s73, %s74
      %p86 = scmp.eq.s32.totalorder %s22, 1
      %p87 = por %p85, %p86
      %p89 = scmp.ne.s32.totalorder %s74, %s88
      %p90 = scmp.eq.s32.totalorder %s22, 0
      %p91 = por %p89, %p90
      %s93 = sadd.s32 %s92, 1
      %p96 = scmp.eq.s32.totalorder %s16, 1
      %p97 = scmp.ne.s32.totalorder %s92, %s94
      %p98 = scmp.eq.s32.totalorder %s16, 0
      %p99 = por %p97, %p98
      %p100 = scmp.ne.s32.totalorder %s92, %s94
      %p101 = scmp.eq.s32.totalorder %s21, 1
      %p102 = por %p100, %p101
      %p103 = scmp.ne.s32.totalorder %s94, %s95
      %p104 = scmp.eq.s32.totalorder %s21, 0
      %p105 = por %p103, %p104
      %p106 = scmp.ne.s32.totalorder %s94, %s95
      %p107 = scmp.eq.s32.totalorder %s22, 1
      %p108 = por %p106, %p107
      %p110 = scmp.ne.s32.totalorder %s95, %s109
      %p111 = scmp.eq.s32.totalorder %s22, 0
      %p112 = por %p110, %p111
      %s113 = ssub.s32 %s23, %s42
      %s114 = ssub.s32 %s24, %s38
      %s115 = sor.u32 %s113, %s114
      %s116 = ssub.s32 %s25, %s34
      %s117 = sor.u32 %s115, %s116
      %p118 = scmp.eq.s32.totalorder %s117, 0
      %s120 = sadd.s32 %s119, 1
      %s121 = scalar_select %p118, %s119, %s120
      %p124 = pneg %p118
      %p125 = scmp.eq.s32.totalorder %s16, 1
      %p126 = por %p124, %p125
      %p127 = scmp.ne.s32.totalorder %s119, %s122
      %p128 = scmp.eq.s32.totalorder %s16, 0
      %p129 = por %p127, %p128
      %p130 = scmp.ne.s32.totalorder %s119, %s122
      %p131 = scmp.eq.s32.totalorder %s21, 1
      %p132 = por %p130, %p131
      %p133 = scmp.ne.s32.totalorder %s122, %s123
      %p134 = scmp.eq.s32.totalorder %s21, 0
      %p135 = por %p133, %p134
      %p136 = scmp.ne.s32.totalorder %s122, %s123
      %p137 = scmp.eq.s32.totalorder %s22, 1
      %p138 = por %p136, %p137
      %p140 = scmp.ne.s32.totalorder %s123, %s139
      %p141 = scmp.eq.s32.totalorder %s22, 0
      %p142 = por %p140, %p141
      %p143 = scmp.le.s32.totalorder 1, %s16
      %p144 = scmp.lt.s32.totalorder %s16, 3
      %p145 = pnand %p143, %p144
      %p146 = pneg %p145
      // Predicated region
      $region9: #{tpu_custom_call.1} parent=5 // pred_check
        _
      $region10: #{tpu_custom_call.1} parent=5 // pred_check_branch
        %148 = sbr.rel (%p145) target = $region12
      $region11: #{tpu_custom_call.1} parent=5 // pred_region
        %s149 = ssub.s32 %s16, 1
        // Predicated region
        $region13: #{tpu_custom_call.1} parent=11 // pred_check
          %p150 = pneg %p84
        $region14: #{tpu_custom_call.1} parent=11 // pred_check_branch
          %152 = sbr.rel (%p150) target = $region16
        $region15: #{tpu_custom_call.1} parent=11 // pred_region
          %s154 = ssub.s32 320, 320
          %155 = vsyncadd [#allocation6], %s154
          %s156 = sshll.u32 [#allocation5], 4
          %s157 = int_to_ptr.vmem [resolvable:$true] %s156
          %162 = dma.hbm_to_vmem [thread:$0]  %s1, 320, %s157, [#allocation6], 64, 64, 4
        $region16: #{tpu_custom_call.1} parent=11 // pred_fallthru
          _
        // Predicated region
        $region17: #{tpu_custom_call.1} parent=11 // pred_check
          %p163 = pneg %p105
        $region18: #{tpu_custom_call.1} parent=11 // pred_check_branch
          %165 = sbr.rel (%p163) target = $region20
        $region19: #{tpu_custom_call.1} parent=11 // pred_region
          %s167 = ssub.s32 16, 16
          %168 = vsyncadd [#allocation6], %s167
          %s170 = sshll.u32 [#allocation7], 4
          %s171 = int_to_ptr.vmem [resolvable:$true] %s170
          %173 = dma.hbm_to_vmem [thread:$0]  %s2, 16, %s171, [#allocation6]
        $region20: #{tpu_custom_call.1} parent=11 // pred_fallthru
          _
      $region12: #{tpu_custom_call.1} parent=5 // pred_fallthru
        _
      %p174 = scmp.lt.s32.totalorder %s16, 2
      // Predicated region
      $region21: #{tpu_custom_call.1} parent=5 // pred_check
        %p175 = pneg %p174
      $region22: #{tpu_custom_call.1} parent=5 // pred_check_branch
        %177 = sbr.rel (%p175) target = $region24
      $region23: #{tpu_custom_call.1} parent=5 // pred_region
        // Predicated region
        $region25: #{tpu_custom_call.1} parent=23 // pred_check
          %p178 = pneg %p57
        $region26: #{tpu_custom_call.1} parent=23 // pred_check_branch
          %180 = sbr.rel (%p178) target = $region28
        $region27: #{tpu_custom_call.1} parent=23 // pred_region
          %s181 = sand.u32 %s47, 1
          %s182 = scalar_lea.sflag [#allocation3], %s181
          %s183 = sand.u32 %s47, 1
          %s184 = smul.addr %s183, 128
          %s185 = scalar_lea.vmem [#allocation2], %s184
          %s186 = smul.u32 32, %s24
          %s188 = ssub.s32 2048, 2048
          %189 = vsyncadd %s182, %s188
          %s190 = smul.addr %s23, 32
          %s191 = sadd.s32 %s186, %s190
          %s192 = smul.addr %s191, 64
          %s193 = scalar_lea.hbm %s0, %s192
          %s194 = sshll.u32 %s185, 4
          %s195 = int_to_ptr.vmem [resolvable:$true] %s194
          %200 = dma.hbm_to_vmem [thread:$0]  %s193, 2048, %s195, %s182, 64, 64, 4
        $region28: #{tpu_custom_call.1} parent=23 // pred_fallthru
          _
      $region24: #{tpu_custom_call.1} parent=5 // pred_fallthru
        _
      %p201 = scmp.le.s32.totalorder 1, %s16
      %p202 = scmp.lt.s32.totalorder %s16, 3
      %p203 = pnand %p201, %p202
      %p204 = pneg %p203
      // Predicated region
      $region29: #{tpu_custom_call.1} parent=5 // pred_check
        _
      $region30: #{tpu_custom_call.1} parent=5 // pred_check_branch
        %206 = sbr.rel (%p203) target = $region32
      $region31: #{tpu_custom_call.1} parent=5 // pred_region
        %s207 = ssub.s32 %s16, 1
        %s208 = sand.u32 %s50, 1
        %s209 = scalar_lea.sflag [#allocation3], %s208
        %s210 = sand.u32 %s50, 1
        %s211 = smul.addr %s210, 128
        %s212 = scalar_lea.vmem [#allocation2], %s211
        // Predicated region
        $region33: #{tpu_custom_call.1} parent=31 // pred_check
          %p213 = pneg %p63
        $region34: #{tpu_custom_call.1} parent=31 // pred_check_branch
          %215 = sbr.rel (%p213) target = $region36
        $region35: #{tpu_custom_call.1} parent=31 // pred_region
          %216 = dma.done %s209, 2048
        $region36: #{tpu_custom_call.1} parent=31 // pred_fallthru
          _
        // Predicated region
        $region37: #{tpu_custom_call.1} parent=31 // pred_check
          %p217 = pneg %p84
        $region38: #{tpu_custom_call.1} parent=31 // pred_check_branch
          %219 = sbr.rel (%p217) target = $region40
        $region39: #{tpu_custom_call.1} parent=31 // pred_region
          %220 = dma.done [#allocation6], 320
        $region40: #{tpu_custom_call.1} parent=31 // pred_fallthru
          _
        // Predicated region
        $region41: #{tpu_custom_call.1} parent=31 // pred_check
          %p221 = pneg %p105
        $region42: #{tpu_custom_call.1} parent=31 // pred_check_branch
          %223 = sbr.rel (%p221) target = $region44
        $region43: #{tpu_custom_call.1} parent=31 // pred_region
          %224 = dma.done [#allocation6], 16
        $region44: #{tpu_custom_call.1} parent=31 // pred_fallthru
          _
        %s225 = sand.u32 %s50, 1
        %s226 = scalar_lea.sflag [#allocation3], %s225
        %s227 = sand.u32 %s50, 1
        %s228 = smul.addr %s227, 128
        %s229 = scalar_lea.vmem [#allocation2], %s228
        %p230 = pneg %p63
        %p231 = pneg %p60
        %p232 = pneg %p84
        %p233 = pneg %p81
        %p234 = pneg %p105
        %p235 = pneg %p102
        %p236 = pneg %p135
        %p237 = pneg %p132
        %s238 = sand.u32 %s122, 1
        %s239 = scalar_lea.sflag [#allocation4], %s238
        %s240 = sand.u32 %s122, 1
        %s241 = smul.addr %s240, 128
        %s242 = scalar_lea.vmem [#allocation8], %s241
        %s243 = smul.u32 32, %s27
        %s244 = smul.u32 32, %s27
        %s246 = smul.u32 %s28, 5
        %s247 = smul.addr %s246, 4
        %s248 = scalar_lea.vmem [#allocation5], %s247
        %v249 = vld [vmem:[%s248] sm:$0xf]
        %v250 = vld [vmem:[%s248 + $0x4] sm:$0xf]
        %v251 = vld [vmem:[%s248 + $0x8] sm:$0xf]
        %v252 = vld [vmem:[%s248 + $0xc] sm:$0xf]
        %v253 = vld [vmem:[%s248 + $0x10] sm:$0x3]
        %s254 = scalar_lea.vmem [#allocation7], %s28
        %v255 = vld [vmem:[%s254] sm:$0x1]
        %v256 = vld [vmem:[%s212] sm:$0xf]
        %v257 = vld [vmem:[%s212 + $0x4] sm:$0xf]
        %v258 = vld [vmem:[%s212 + $0x8] sm:$0xf]
        %v259 = vld [vmem:[%s212 + $0xc] sm:$0xf]
        %v260 = vld [vmem:[%s212 + $0x10] sm:$0xf]
        %v261 = vld [vmem:[%s212 + $0x14] sm:$0xf]
        %v262 = vld [vmem:[%s212 + $0x18] sm:$0xf]
        %v263 = vld [vmem:[%s212 + $0x1c] sm:$0xf]
        %v264 = vld [vmem:[%s212 + $0x20] sm:$0xf]
        %v265 = vld [vmem:[%s212 + $0x24] sm:$0xf]
        %v266 = vld [vmem:[%s212 + $0x28] sm:$0xf]
        %v267 = vld [vmem:[%s212 + $0x2c] sm:$0xf]
        %v268 = vld [vmem:[%s212 + $0x30] sm:$0xf]
        %v269 = vld [vmem:[%s212 + $0x34] sm:$0xf]
        %v270 = vld [vmem:[%s212 + $0x38] sm:$0xf]
        %v271 = vld [vmem:[%s212 + $0x3c] sm:$0xf]
        %v272 = vld [vmem:[%s212 + $0x40] sm:$0xf]
        %v273 = vld [vmem:[%s212 + $0x44] sm:$0xf]
        %v274 = vld [vmem:[%s212 + $0x48] sm:$0xf]
        %v275 = vld [vmem:[%s212 + $0x4c] sm:$0xf]
        %v276 = vld [vmem:[%s212 + $0x50] sm:$0xf]
        %v277 = vld [vmem:[%s212 + $0x54] sm:$0xf]
        %v278 = vld [vmem:[%s212 + $0x58] sm:$0xf]
        %v279 = vld [vmem:[%s212 + $0x5c] sm:$0xf]
        %v280 = vld [vmem:[%s212 + $0x60] sm:$0xf]
        %v281 = vld [vmem:[%s212 + $0x64] sm:$0xf]
        %v282 = vld [vmem:[%s212 + $0x68] sm:$0xf]
        %v283 = vld [vmem:[%s212 + $0x6c] sm:$0xf]
        %v284 = vld [vmem:[%s212 + $0x70] sm:$0xf]
        %v285 = vld [vmem:[%s212 + $0x74] sm:$0xf]
        %v286 = vld [vmem:[%s212 + $0x78] sm:$0xf]
        %v287 = vld [vmem:[%s212 + $0x7c] sm:$0xf]
        %v289 = vlaneseq
        %v290 = vshrl.u32 %v289, 7
        %v291 = vsub.s32 0, %v290
        %v292 = vrot.slane %v255, %v291
        %v326 = vunpack.c.l.b16 %v256
        %v327 = vunpack.c.l.b16 %v257
        %v328 = vunpack.c.l.b16 %v258
        %v329 = vunpack.c.l.b16 %v259
        %v330 = vunpack.c.l.b16 %v260
        %v331 = vunpack.c.l.b16 %v261
        %v332 = vunpack.c.l.b16 %v262
        %v333 = vunpack.c.l.b16 %v263
        %v334 = vunpack.c.l.b16 %v264
        %v335 = vunpack.c.l.b16 %v265
        %v336 = vunpack.c.l.b16 %v266
        %v337 = vunpack.c.l.b16 %v267
        %v338 = vunpack.c.l.b16 %v268
        %v339 = vunpack.c.l.b16 %v269
        %v340 = vunpack.c.l.b16 %v270
        %v341 = vunpack.c.l.b16 %v271
        %v342 = vunpack.c.l.b16 %v272
        %v343 = vunpack.c.l.b16 %v273
        %v344 = vunpack.c.l.b16 %v274
        %v345 = vunpack.c.l.b16 %v275
        %v346 = vunpack.c.l.b16 %v276
        %v347 = vunpack.c.l.b16 %v277
        %v348 = vunpack.c.l.b16 %v278
        %v349 = vunpack.c.l.b16 %v279
        %v350 = vunpack.c.l.b16 %v280
        %v351 = vunpack.c.l.b16 %v281
        %v352 = vunpack.c.l.b16 %v282
        %v353 = vunpack.c.l.b16 %v283
        %v354 = vunpack.c.l.b16 %v284
        %v355 = vunpack.c.l.b16 %v285
        %v356 = vunpack.c.l.b16 %v286
        %v357 = vunpack.c.l.b16 %v287
        %v358 = vpack.c.b16 %v327, %v326
        %v359 = vpack.c.b16 %v329, %v328
        %v360 = vpack.c.b16 %v331, %v330
        %v361 = vpack.c.b16 %v333, %v332
        %v362 = vpack.c.b16 %v335, %v334
        %v363 = vpack.c.b16 %v337, %v336
        %v364 = vpack.c.b16 %v339, %v338
        %v365 = vpack.c.b16 %v341, %v340
        %v366 = vpack.c.b16 %v343, %v342
        %v367 = vpack.c.b16 %v345, %v344
        %v368 = vpack.c.b16 %v347, %v346
        %v369 = vpack.c.b16 %v349, %v348
        %v370 = vpack.c.b16 %v351, %v350
        %v371 = vpack.c.b16 %v353, %v352
        %v372 = vpack.c.b16 %v355, %v354
        %v373 = vpack.c.b16 %v357, %v356
        %v379 = vunpack.c.l.b16 %v249
        %v380 = vunpack.c.l.b16 %v250
        %v381 = vunpack.c.l.b16 %v251
        %v382 = vunpack.c.l.b16 %v252
        %v383 = vunpack.c.l.b16 %v253
        %v384 = vpack.c.b16 %v380, %v379
        %v385 = vpack.c.b16 %v382, %v381
        %v386 = vpack.c.b16 %v383, %v383
        %vm389 = vcmask 293888
        %v391 = vsel %vm389, %v358, 0
        %v394 = vsel %vm389, %v359, 0
        %v397 = vsel %vm389, %v360, 0
        %v400 = vsel %vm389, %v361, 0
        %v403 = vsel %vm389, %v362, 0
        %v406 = vsel %vm389, %v363, 0
        %v409 = vsel %vm389, %v364, 0
        %v412 = vsel %vm389, %v365, 0
        %v415 = vsel %vm389, %v366, 0
        %v418 = vsel %vm389, %v367, 0
        %v421 = vsel %vm389, %v368, 0
        %v424 = vsel %vm389, %v369, 0
        %v427 = vsel %vm389, %v370, 0
        %v430 = vsel %vm389, %v371, 0
        %v433 = vsel %vm389, %v372, 0
        %v436 = vsel %vm389, %v373, 0
        %vm438 = vcmask 1041408
        %v440 = vsel %vm438, %v386, 0
        %442 = vmatprep.subr.bf16.mxu0 0
        %443 = vmatpush1.bf16.msra.mxu0 %v384
        %444 = vmatprep.subr.bf16.mxu0 0
        %445 = vmatpush1.bf16.msra.mxu0 %v385
        %446 = vmatprep.subr.bf16.mxu0 0
        %447 = vmatpush1.bf16.msra.mxu0 %v440
        %448 = vmatprep.subr.bf16.mxu0 0
        %449 = vmatpush1.bf16.msra.mxu0 0
        %450 = vmatprep.subr.bf16.mxu0 0
        %451 = vmatpush1.bf16.msra.mxu0 0
        %452 = vmatprep.subr.bf16.mxu0 0
        %453 = vmatpush1.bf16.msra.mxu0 0
        %454 = vmatprep.subr.bf16.mxu0 0
        %455 = vmatpush1.bf16.msra.mxu0 0
        %456 = vmatprep.subr.bf16.mxu0 0
        %457 = vmatpush1.bf16.msra.mxu0 0
        %458 = vmatprep.subr.bf16.mxu0 0
        %459 = vmatpush1.bf16.msra.mxu0 0
        %460 = vmatprep.subr.bf16.mxu0 0
        %461 = vmatpush1.bf16.msra.mxu0 0
        %462 = vmatprep.subr.bf16.mxu0 0
        %463 = vmatpush1.bf16.msra.mxu0 0
        %464 = vmatprep.subr.bf16.mxu0 0
        %465 = vmatpush1.bf16.msra.mxu0 0
        %466 = vmatprep.subr.bf16.mxu0 0
        %467 = vmatpush1.bf16.msra.mxu0 0
        %468 = vmatprep.subr.bf16.mxu0 0
        %469 = vmatpush1.bf16.msra.mxu0 0
        %470 = vmatprep.subr.bf16.mxu0 0
        %471 = vmatpush1.bf16.msra.mxu0 0
        %472 = vmatprep.subr.bf16.mxu0 0
        %473 = vmatpush1.bf16.msra.mxu0 0
        %474 = vmatprep.mubr.bf16.mxu0 0
        %475 = vmatmul.mubr.bf16.gmra.mrb[0].mxu0 %v391
        %v476 = vpop.f32.mrb[0].mxu0
        %v477 = vadd.f32 %v292, %v476
        %v478 = vpop.f32.mrb[0].mxu0
        %v479 = vpop.f32.mrb[0].mxu0
        %v480 = vadd.f32 %v292, %v479
        %v481 = vpop.f32.mrb[0].mxu0
        %482 = vmatprep.mubr.bf16.mxu0 0
        %483 = vmatmul.mubr.bf16.gmra.mrb[0].mxu0 %v394
        %v484 = vpop.f32.mrb[0].mxu0
        %v485 = vadd.f32 %v292, %v484
        %v486 = vpop.f32.mrb[0].mxu0
        %v487 = vpop.f32.mrb[0].mxu0
        %v488 = vadd.f32 %v292, %v487
        %v489 = vpop.f32.mrb[0].mxu0
        %490 = vmatprep.mubr.bf16.mxu0 0
        %491 = vmatmul.mubr.bf16.gmra.mrb[0].mxu0 %v397
        %v492 = vpop.f32.mrb[0].mxu0
        %v493 = vadd.f32 %v292, %v492
        %v494 = vpop.f32.mrb[0].mxu0
        %v495 = vpop.f32.mrb[0].mxu0
        %v496 = vadd.f32 %v292, %v495
        %v497 = vpop.f32.mrb[0].mxu0
        %498 = vmatprep.mubr.bf16.mxu0 0
        %499 = vmatmul.mubr.bf16.gmra.mrb[0].mxu0 %v400
        %v500 = vpop.f32.mrb[0].mxu0
        %v501 = vadd.f32 %v292, %v500
        %v502 = vpop.f32.mrb[0].mxu0
        %v503 = vpop.f32.mrb[0].mxu0
        %v504 = vadd.f32 %v292, %v503
        %v505 = vpop.f32.mrb[0].mxu0
        %506 = vmatprep.mubr.bf16.mxu0 0
        %507 = vmatmul.mubr.bf16.gmra.mrb[0].mxu0 %v403
        %v508 = vpop.f32.mrb[0].mxu0
        %v509 = vadd.f32 %v292, %v508
        %v510 = vpop.f32.mrb[0].mxu0
        %v511 = vpop.f32.mrb[0].mxu0
        %v512 = vadd.f32 %v292, %v511
        %v513 = vpop.f32.mrb[0].mxu0
        %514 = vmatprep.mubr.bf16.mxu0 0
        %515 = vmatmul.mubr.bf16.gmra.mrb[0].mxu0 %v406
        %v516 = vpop.f32.mrb[0].mxu0
        %v517 = vadd.f32 %v292, %v516
        %v518 = vpop.f32.mrb[0].mxu0
        %v519 = vpop.f32.mrb[0].mxu0
        %v520 = vadd.f32 %v292, %v519
        %v521 = vpop.f32.mrb[0].mxu0
        %522 = vmatprep.mubr.bf16.mxu0 0
        %523 = vmatmul.mubr.bf16.gmra.mrb[0].mxu0 %v409
        %v524 = vpop.f32.mrb[0].mxu0
        %v525 = vadd.f32 %v292, %v524
        %v526 = vpop.f32.mrb[0].mxu0
        %v527 = vpop.f32.mrb[0].mxu0
        %v528 = vadd.f32 %v292, %v527
        %v529 = vpop.f32.mrb[0].mxu0
        %530 = vmatprep.mubr.bf16.mxu0 0
        %531 = vmatmul.mubr.bf16.gmra.mrb[0].mxu0 %v412
        %v532 = vpop.f32.mrb[0].mxu0
        %v533 = vadd.f32 %v292, %v532
        %v534 = vpop.f32.mrb[0].mxu0
        %v535 = vpop.f32.mrb[0].mxu0
        %v536 = vadd.f32 %v292, %v535
        %v537 = vpop.f32.mrb[0].mxu0
        %538 = vmatprep.mubr.bf16.mxu0 0
        %539 = vmatmul.mubr.bf16.gmra.mrb[0].mxu0 %v415
        %v540 = vpop.f32.mrb[0].mxu0
        %v541 = vadd.f32 %v292, %v540
        %v542 = vpop.f32.mrb[0].mxu0
        %v543 = vpop.f32.mrb[0].mxu0
        %v544 = vadd.f32 %v292, %v543
        %v545 = vpop.f32.mrb[0].mxu0
        %546 = vmatprep.mubr.bf16.mxu0 0
        %547 = vmatmul.mubr.bf16.gmra.mrb[0].mxu0 %v418
        %v548 = vpop.f32.mrb[0].mxu0
        %v549 = vadd.f32 %v292, %v548
        %v550 = vpop.f32.mrb[0].mxu0
        %v551 = vpop.f32.mrb[0].mxu0
        %v552 = vadd.f32 %v292, %v551
        %v553 = vpop.f32.mrb[0].mxu0
        %554 = vmatprep.mubr.bf16.mxu0 0
        %555 = vmatmul.mubr.bf16.gmra.mrb[0].mxu0 %v421
        %v556 = vpop.f32.mrb[0].mxu0
        %v557 = vadd.f32 %v292, %v556
        %v558 = vpop.f32.mrb[0].mxu0
        %v559 = vpop.f32.mrb[0].mxu0
        %v560 = vadd.f32 %v292, %v559
        %v561 = vpop.f32.mrb[0].mxu0
        %562 = vmatprep.mubr.bf16.mxu0 0
        %563 = vmatmul.mubr.bf16.gmra.mrb[0].mxu0 %v424
        %v564 = vpop.f32.mrb[0].mxu0
        %v565 = vadd.f32 %v292, %v564
        %v566 = vpop.f32.mrb[0].mxu0
        %v567 = vpop.f32.mrb[0].mxu0
        %v568 = vadd.f32 %v292, %v567
        %v569 = vpop.f32.mrb[0].mxu0
        %570 = vmatprep.mubr.bf16.mxu0 0
        %571 = vmatmul.mubr.bf16.gmra.mrb[0].mxu0 %v427
        %v572 = vpop.f32.mrb[0].mxu0
        %v573 = vadd.f32 %v292, %v572
        %v574 = vpop.f32.mrb[0].mxu0
        %v575 = vpop.f32.mrb[0].mxu0
        %v576 = vadd.f32 %v292, %v575
        %v577 = vpop.f32.mrb[0].mxu0
        %578 = vmatprep.mubr.bf16.mxu0 0
        %579 = vmatmul.mubr.bf16.gmra.mrb[0].mxu0 %v430
        %v580 = vpop.f32.mrb[0].mxu0
        %v581 = vadd.f32 %v292, %v580
        %v582 = vpop.f32.mrb[0].mxu0
        %v583 = vpop.f32.mrb[0].mxu0
        %v584 = vadd.f32 %v292, %v583
        %v585 = vpop.f32.mrb[0].mxu0
        %586 = vmatprep.mubr.bf16.mxu0 0
        %587 = vmatmul.mubr.bf16.gmra.mrb[0].mxu0 %v433
        %v588 = vpop.f32.mrb[0].mxu0
        %v589 = vadd.f32 %v292, %v588
        %v590 = vpop.f32.mrb[0].mxu0
        %v591 = vpop.f32.mrb[0].mxu0
        %v592 = vadd.f32 %v292, %v591
        %v593 = vpop.f32.mrb[0].mxu0
        %594 = vmatprep.mubr.bf16.mxu0 0
        %595 = vmatmul.mubr.bf16.gmra.mrb[0].mxu0 %v436
        %v596 = vpop.f32.mrb[0].mxu0
        %v597 = vadd.f32 %v292, %v596
        %v598 = vpop.f32.mrb[0].mxu0
        %v599 = vpop.f32.mrb[0].mxu0
        %v600 = vadd.f32 %v292, %v599
        %v601 = vpop.f32.mrb[0].mxu0
        %602 = vdwg.mxu0
        %vm603 = vcmp.ge.f32.partialorder %v477, 0.0
        %vm604 = vcmp.ge.f32.partialorder %v480, 0.0
        %vm605 = vcmp.ge.f32.partialorder %v485, 0.0
        %vm606 = vcmp.ge.f32.partialorder %v488, 0.0
        %vm607 = vcmp.ge.f32.partialorder %v493, 0.0
        %vm608 = vcmp.ge.f32.partialorder %v496, 0.0
        %vm609 = vcmp.ge.f32.partialorder %v501, 0.0
        %vm610 = vcmp.ge.f32.partialorder %v504, 0.0
        %vm611 = vcmp.ge.f32.partialorder %v509, 0.0
        %vm612 = vcmp.ge.f32.partialorder %v512, 0.0
        %vm613 = vcmp.ge.f32.partialorder %v517, 0.0
        %vm614 = vcmp.ge.f32.partialorder %v520, 0.0
        %vm615 = vcmp.ge.f32.partialorder %v525, 0.0
        %vm616 = vcmp.ge.f32.partialorder %v528, 0.0
        %vm617 = vcmp.ge.f32.partialorder %v533, 0.0
        %vm618 = vcmp.ge.f32.partialorder %v536, 0.0
        %vm619 = vcmp.ge.f32.partialorder %v541, 0.0
        %vm620 = vcmp.ge.f32.partialorder %v544, 0.0
        %vm621 = vcmp.ge.f32.partialorder %v549, 0.0
        %vm622 = vcmp.ge.f32.partialorder %v552, 0.0
        %vm623 = vcmp.ge.f32.partialorder %v557, 0.0
        %vm624 = vcmp.ge.f32.partialorder %v560, 0.0
        %vm625 = vcmp.ge.f32.partialorder %v565, 0.0
        %vm626 = vcmp.ge.f32.partialorder %v568, 0.0
        %vm627 = vcmp.ge.f32.partialorder %v573, 0.0
        %vm628 = vcmp.ge.f32.partialorder %v576, 0.0
        %vm629 = vcmp.ge.f32.partialorder %v581, 0.0
        %vm630 = vcmp.ge.f32.partialorder %v584, 0.0
        %vm631 = vcmp.ge.f32.partialorder %v589, 0.0
        %vm632 = vcmp.ge.f32.partialorder %v592, 0.0
        %vm633 = vcmp.ge.f32.partialorder %v597, 0.0
        %vm634 = vcmp.ge.f32.partialorder %v600, 0.0
        %v635 = vmul.f32 %v477, 0.01
        %v636 = vmul.f32 %v480, 0.01
        %v637 = vmul.f32 %v485, 0.01
        %v638 = vmul.f32 %v488, 0.01
        %v639 = vmul.f32 %v493, 0.01
        %v640 = vmul.f32 %v496, 0.01
        %v641 = vmul.f32 %v501, 0.01
        %v642 = vmul.f32 %v504, 0.01
        %v643 = vmul.f32 %v509, 0.01
        %v644 = vmul.f32 %v512, 0.01
        %v645 = vmul.f32 %v517, 0.01
        %v646 = vmul.f32 %v520, 0.01
        %v647 = vmul.f32 %v525, 0.01
        %v648 = vmul.f32 %v528, 0.01
        %v649 = vmul.f32 %v533, 0.01
        %v650 = vmul.f32 %v536, 0.01
        %v651 = vmul.f32 %v541, 0.01
        %v652 = vmul.f32 %v544, 0.01
        %v653 = vmul.f32 %v549, 0.01
        %v654 = vmul.f32 %v552, 0.01
        %v655 = vmul.f32 %v557, 0.01
        %v656 = vmul.f32 %v560, 0.01
        %v657 = vmul.f32 %v565, 0.01
        %v658 = vmul.f32 %v568, 0.01
        %v659 = vmul.f32 %v573, 0.01
        %v660 = vmul.f32 %v576, 0.01
        %v661 = vmul.f32 %v581, 0.01
        %v662 = vmul.f32 %v584, 0.01
        %v663 = vmul.f32 %v589, 0.01
        %v664 = vmul.f32 %v592, 0.01
        %v665 = vmul.f32 %v597, 0.01
        %v666 = vmul.f32 %v600, 0.01
        %v667 = vsel %vm603, %v477, %v635
        %v668 = vsel %vm604, %v480, %v636
        %v669 = vsel %vm605, %v485, %v637
        %v670 = vsel %vm606, %v488, %v638
        %v671 = vsel %vm607, %v493, %v639
        %v672 = vsel %vm608, %v496, %v640
        %v673 = vsel %vm609, %v501, %v641
        %v674 = vsel %vm610, %v504, %v642
        %v675 = vsel %vm611, %v509, %v643
        %v676 = vsel %vm612, %v512, %v644
        %v677 = vsel %vm613, %v517, %v645
        %v678 = vsel %vm614, %v520, %v646
        %v679 = vsel %vm615, %v525, %v647
        %v680 = vsel %vm616, %v528, %v648
        %v681 = vsel %vm617, %v533, %v649
        %v682 = vsel %vm618, %v536, %v650
        %v683 = vsel %vm619, %v541, %v651
        %v684 = vsel %vm620, %v544, %v652
        %v685 = vsel %vm621, %v549, %v653
        %v686 = vsel %vm622, %v552, %v654
        %v687 = vsel %vm623, %v557, %v655
        %v688 = vsel %vm624, %v560, %v656
        %v689 = vsel %vm625, %v565, %v657
        %v690 = vsel %vm626, %v568, %v658
        %v691 = vsel %vm627, %v573, %v659
        %v692 = vsel %vm628, %v576, %v660
        %v693 = vsel %vm629, %v581, %v661
        %v694 = vsel %vm630, %v584, %v662
        %v695 = vsel %vm631, %v589, %v663
        %v696 = vsel %vm632, %v592, %v664
        %v697 = vsel %vm633, %v597, %v665
        %v698 = vsel %vm634, %v600, %v666
        %v699 = vpack.c.bf16 %v668, %v667
        %v700 = vpack.c.bf16 %v670, %v669
        %v701 = vpack.c.bf16 %v672, %v671
        %v702 = vpack.c.bf16 %v674, %v673
        %v703 = vpack.c.bf16 %v676, %v675
        %v704 = vpack.c.bf16 %v678, %v677
        %v705 = vpack.c.bf16 %v680, %v679
        %v706 = vpack.c.bf16 %v682, %v681
        %v707 = vpack.c.bf16 %v684, %v683
        %v708 = vpack.c.bf16 %v686, %v685
        %v709 = vpack.c.bf16 %v688, %v687
        %v710 = vpack.c.bf16 %v690, %v689
        %v711 = vpack.c.bf16 %v692, %v691
        %v712 = vpack.c.bf16 %v694, %v693
        %v713 = vpack.c.bf16 %v696, %v695
        %v714 = vpack.c.bf16 %v698, %v697
        %v731 = vunpack.c.l.b16 %v699
        %v732 = vunpack.c.h.b16 %v699
        %v733 = vunpack.c.l.b16 %v700
        %v734 = vunpack.c.h.b16 %v700
        %v735 = vunpack.c.l.b16 %v701
        %v736 = vunpack.c.h.b16 %v701
        %v737 = vunpack.c.l.b16 %v702
        %v738 = vunpack.c.h.b16 %v702
        %v739 = vunpack.c.l.b16 %v703
        %v740 = vunpack.c.h.b16 %v703
        %v741 = vunpack.c.l.b16 %v704
        %v742 = vunpack.c.h.b16 %v704
        %v743 = vunpack.c.l.b16 %v705
        %v744 = vunpack.c.h.b16 %v705
        %v745 = vunpack.c.l.b16 %v706
        %v746 = vunpack.c.h.b16 %v706
        %v747 = vunpack.c.l.b16 %v707
        %v748 = vunpack.c.h.b16 %v707
        %v749 = vunpack.c.l.b16 %v708
        %v750 = vunpack.c.h.b16 %v708
        %v751 = vunpack.c.l.b16 %v709
        %v752 = vunpack.c.h.b16 %v709
        %v753 = vunpack.c.l.b16 %v710
        %v754 = vunpack.c.h.b16 %v710
        %v755 = vunpack.c.l.b16 %v711
        %v756 = vunpack.c.h.b16 %v711
        %v757 = vunpack.c.l.b16 %v712
        %v758 = vunpack.c.h.b16 %v712
        %v759 = vunpack.c.l.b16 %v713
        %v760 = vunpack.c.h.b16 %v713
        %v761 = vunpack.c.l.b16 %v714
        %v762 = vunpack.c.h.b16 %v714
        %v763 = vpack.c.b16 %v731, %v731
        %v764 = vpack.c.b16 %v732, %v732
        %v765 = vpack.c.b16 %v733, %v733
        %v766 = vpack.c.b16 %v734, %v734
        %v767 = vpack.c.b16 %v735, %v735
        %v768 = vpack.c.b16 %v736, %v736
        %v769 = vpack.c.b16 %v737, %v737
        %v770 = vpack.c.b16 %v738, %v738
        %v771 = vpack.c.b16 %v739, %v739
        %v772 = vpack.c.b16 %v740, %v740
        %v773 = vpack.c.b16 %v741, %v741
        %v774 = vpack.c.b16 %v742, %v742
        %v775 = vpack.c.b16 %v743, %v743
        %v776 = vpack.c.b16 %v744, %v744
        %v777 = vpack.c.b16 %v745, %v745
        %v778 = vpack.c.b16 %v746, %v746
        %v779 = vpack.c.b16 %v747, %v747
        %v780 = vpack.c.b16 %v748, %v748
        %v781 = vpack.c.b16 %v749, %v749
        %v782 = vpack.c.b16 %v750, %v750
        %v783 = vpack.c.b16 %v751, %v751
        %v784 = vpack.c.b16 %v752, %v752
        %v785 = vpack.c.b16 %v753, %v753
        %v786 = vpack.c.b16 %v754, %v754
        %v787 = vpack.c.b16 %v755, %v755
        %v788 = vpack.c.b16 %v756, %v756
        %v789 = vpack.c.b16 %v757, %v757
        %v790 = vpack.c.b16 %v758, %v758
        %v791 = vpack.c.b16 %v759, %v759
        %v792 = vpack.c.b16 %v760, %v760
        %v793 = vpack.c.b16 %v761, %v761
        %v794 = vpack.c.b16 %v762, %v762
        %827 = vst [vmem:[%s242] sm:$0xf] %v763
        %828 = vst [vmem:[%s242 + $0x4] sm:$0xf] %v764
        %829 = vst [vmem:[%s242 + $0x8] sm:$0xf] %v765
        %830 = vst [vmem:[%s242 + $0xc] sm:$0xf] %v766
        %831 = vst [vmem:[%s242 + $0x10] sm:$0xf] %v767
        %832 = vst [vmem:[%s242 + $0x14] sm:$0xf] %v768
        %833 = vst [vmem:[%s242 + $0x18] sm:$0xf] %v769
        %834 = vst [vmem:[%s242 + $0x1c] sm:$0xf] %v770
        %835 = vst [vmem:[%s242 + $0x20] sm:$0xf] %v771
        %836 = vst [vmem:[%s242 + $0x24] sm:$0xf] %v772
        %837 = vst [vmem:[%s242 + $0x28] sm:$0xf] %v773
        %838 = vst [vmem:[%s242 + $0x2c] sm:$0xf] %v774
        %839 = vst [vmem:[%s242 + $0x30] sm:$0xf] %v775
        %840 = vst [vmem:[%s242 + $0x34] sm:$0xf] %v776
        %841 = vst [vmem:[%s242 + $0x38] sm:$0xf] %v777
        %842 = vst [vmem:[%s242 + $0x3c] sm:$0xf] %v778
        %843 = vst [vmem:[%s242 + $0x40] sm:$0xf] %v779
        %844 = vst [vmem:[%s242 + $0x44] sm:$0xf] %v780
        %845 = vst [vmem:[%s242 + $0x48] sm:$0xf] %v781
        %846 = vst [vmem:[%s242 + $0x4c] sm:$0xf] %v782
        %847 = vst [vmem:[%s242 + $0x50] sm:$0xf] %v783
        %848 = vst [vmem:[%s242 + $0x54] sm:$0xf] %v784
        %849 = vst [vmem:[%s242 + $0x58] sm:$0xf] %v785
        %850 = vst [vmem:[%s242 + $0x5c] sm:$0xf] %v786
        %851 = vst [vmem:[%s242 + $0x60] sm:$0xf] %v787
        %852 = vst [vmem:[%s242 + $0x64] sm:$0xf] %v788
        %853 = vst [vmem:[%s242 + $0x68] sm:$0xf] %v789
        %854 = vst [vmem:[%s242 + $0x6c] sm:$0xf] %v790
        %855 = vst [vmem:[%s242 + $0x70] sm:$0xf] %v791
        %856 = vst [vmem:[%s242 + $0x74] sm:$0xf] %v792
        %857 = vst [vmem:[%s242 + $0x78] sm:$0xf] %v793
        %858 = vst [vmem:[%s242 + $0x7c] sm:$0xf] %v794
        %s859 = sand.u32 %s122, 1
        %s860 = scalar_lea.sflag [#allocation4], %s859
        %s861 = sand.u32 %s122, 1
        %s862 = smul.addr %s861, 128
        %s863 = scalar_lea.vmem [#allocation8], %s862
        // Predicated region
        $region45: #{tpu_custom_call.1} parent=31 // pred_check
          %p864 = pneg %p132
        $region46: #{tpu_custom_call.1} parent=31 // pred_check_branch
          %866 = sbr.rel (%p864) target = $region48
        $region47: #{tpu_custom_call.1} parent=31 // pred_region
          %s867 = smul.u32 32, %s27
          %s869 = ssub.s32 2048, 2048
          %870 = vsyncadd %s860, %s869
          %s871 = sadd.s32 %s28, %s867
          %s872 = smul.addr %s26, 32
          %s873 = sadd.s32 %s871, %s872
          %s874 = smul.addr %s873, 64
          %s875 = scalar_lea.hbm %s3, %s874
          %s876 = sshll.u32 %s863, 4
          %s877 = int_to_ptr.vmem [resolvable:$true] %s876
          %882 = dma.vmem_to_hbm [thread:$0]  %s877, 2048, %s875, %s860, 64, 64, 4
        $region48: #{tpu_custom_call.1} parent=31 // pred_fallthru
          _
      $region32: #{tpu_custom_call.1} parent=5 // pred_fallthru
        _
      %p883 = scmp.le.s32.totalorder 2, %s16
      // Predicated region
      $region49: #{tpu_custom_call.1} parent=5 // pred_check
        %p884 = pneg %p883
      $region50: #{tpu_custom_call.1} parent=5 // pred_check_branch
        %886 = sbr.rel (%p884) target = $region52
      $region51: #{tpu_custom_call.1} parent=5 // pred_region
        %s887 = ssub.s32 %s16, 2
        // Predicated region
        $region53: #{tpu_custom_call.1} parent=51 // pred_check
          %p888 = pneg %p138
        $region54: #{tpu_custom_call.1} parent=51 // pred_check_branch
          %890 = sbr.rel (%p888) target = $region56
        $region55: #{tpu_custom_call.1} parent=51 // pred_region
          %s891 = sand.u32 %s123, 1
          %s892 = scalar_lea.sflag [#allocation4], %s891
          %s893 = sand.u32 %s123, 1
          %s894 = smul.addr %s893, 128
          %s895 = scalar_lea.vmem [#allocation8], %s894
          %896 = dma.done %s892, 2048
        $region56: #{tpu_custom_call.1} parent=51 // pred_fallthru
          _
      $region52: #{tpu_custom_call.1} parent=5 // pred_fallthru
        _
    $region6: #{tpu_custom_call.1} parent=1 // loop_footer
      %s20 = sadd.s32 1, %s16
    $region7: #{tpu_custom_call.1} parent=1 // loop_footer_branch
      %15 = sbr.rel target = $region3
    $region8: #{tpu_custom_call.1} parent=1 // loop_exit
      _
    %897 = vsyncpa [#allocation3], 1
    %s898 = scalar_lea.sflag [#allocation3], 1
    %899 = vsyncpa %s898, 1
    %900 = vsyncpa [#allocation6], 1
    %901 = vsyncpa [#allocation4], 1
    %s902 = scalar_lea.sflag [#allocation4], 1
    %903 = vsyncpa %s902, 1

</llo_original>
